<compile_context>
chip_gen: v7x
topology: tpu7x:2x2x1
jax: 0.10.0
libtpu: 0.0.40
codegen_flags: <defaults>
</compile_context>

<pallas_src>
import jax
import jax.numpy as jnp
from jax.experimental import pallas as pl
from jax.experimental.pallas import tpu as pltpu

FEAT_CH = 1024   # class_head input channels in the PyTorch module
STRIDE = 16      # scale_factor of the module (backbone stride == upsample factor)
CROP = 8         # crop window size (assumed)


# ----------------------------------------------------------------------------
# Kernel 1: feature extractor surrogate (stride-16 conv as matmul + frozenBN + relu)
# ----------------------------------------------------------------------------
def _feat_kernel(p_ref, w_ref, s_ref, b_ref, o_ref):
    acc = jnp.dot(p_ref[...], w_ref[...], preferred_element_type=jnp.float32)
    o_ref[...] = jnp.maximum(acc * s_ref[...] + b_ref[...], 0.0).astype(o_ref.dtype)


def feature_extractor(patches, w_mat, scale, bias, tile_rows=512):
    n, k = patches.shape
    if n <= 8:
        tile = n                                      # full-extent block (always legal)
    else:
        # >=2 grid steps when possible (both v7x TensorCores), tile multiple of 8 sublanes
        tile = min(tile_rows, max(8, (n // 2 // 8) * 8))
    n_pad = pl.cdiv(n, tile) * tile
    if n_pad != n:
        patches = jnp.pad(patches, ((0, n_pad - n), (0, 0)))

    out = pl.pallas_call(
        _feat_kernel,
        out_shape=jax.ShapeDtypeStruct((n_pad, FEAT_CH), jnp.bfloat16),
        grid_spec=pltpu.PrefetchScalarGridSpec(
            num_scalar_prefetch=0,
            grid=(n_pad // tile,),
            in_specs=[pl.BlockSpec((tile, k), lambda i: (i, 0)),
                      pl.BlockSpec((k, FEAT_CH), lambda i: (0, 0)),
                      pl.BlockSpec((1, FEAT_CH), lambda i: (0, 0)),
                      pl.BlockSpec((1, FEAT_CH), lambda i: (0, 0))],
            out_specs=pl.BlockSpec((tile, FEAT_CH), lambda i: (i, 0)),
        ),
        compiler_params=pltpu.CompilerParams(dimension_semantics=("parallel",)),
    )(patches, w_mat, scale, bias)
    return out[:n] if n_pad != n else out


# ----------------------------------------------------------------------------
# Kernel 2: fused bilinear-x16-upsample + crop + GAP + Linear(1024, 1)
#           (stencil DMA: only the <=3x3 low-res cells the crop touches are read)
# ----------------------------------------------------------------------------
def _make_crop_head_kernel(h, w):
    assert h >= 2 and w >= 2, "backbone output must be at least 2x2"
    h_out, w_out = h * STRIDE, w * STRIDE
    win_h, win_w = min(3, h), min(3, w)
    ys = (h - 1) / (h_out - 1)          # align_corners=True source-coordinate scale
    xs = (w - 1) / (w_out - 1)
    inv_area = 1.0 / float(CROP * CROP)

    def kernel(pts_ref, f_hbm, wh_ref, bh_ref, o_ref, fbuf, sem):
        b = pl.program_id(0)
        cy = pts_ref[b, 0]
        cx = pts_ref[b, 1]
        y0 = jnp.clip(cy - CROP // 2, 0, h_out - CROP)          # int32 scalar
        x0 = jnp.clip(cx - CROP // 2, 0, w_out - CROP)

        # first low-res row/col the 8x8 crop can touch (exact integer math), clamped so
        # the static (win_h, win_w) window stays in bounds.
        ry0 = jnp.minimum((y0 * (h - 1)) // (h_out - 1), h - win_h)
        rx0 = jnp.minimum((x0 * (w - 1)) // (w_out - 1), w - win_w)

        # fetch only the stencil window (<=3x3x1024 bf16 ~ 18 KiB) from HBM; overlap the
        # DMA with the weight computation below.
        cp = pltpu.make_async_copy(
            f_hbm.at[b, pl.ds(ry0, win_h), pl.ds(rx0, win_w), :], fbuf, sem)
        cp.start()

        # accumulated bilinear weights of the CROPxCROP output window onto each window
        # row / column, computed lane-dense on tiny (win, CROP) tiles (no f32 scalars).
        d = jax.lax.broadcasted_iota(jnp.int32, (1, CROP), 1)           # (1, 8)
        sy = (d + y0).astype(jnp.float32) * ys                          # (1, 8)
        iy0 = jnp.clip(jnp.floor(sy), 0.0, float(h - 2))
        fy = sy - iy0
        rows = (jax.lax.broadcasted_iota(jnp.int32, (win_h, 1), 0)
                + ry0).astype(jnp.float32)                              # (win_h, 1)
        wy = jnp.sum(jnp.where(rows == iy0, 1.0 - fy, 0.0)
                     + jnp.where(rows == iy0 + 1.0, fy, 0.0),
                     axis=1, keepdims=True)                             # (win_h, 1)

        d_col = jax.lax.broadcasted_iota(jnp.int32, (CROP, 1), 0)       # (8, 1)
        sx = (d_col + x0).astype(jnp.float32) * xs                      # (8, 1)
        ix0 = jnp.clip(jnp.floor(sx), 0.0, float(w - 2))
        fx = sx - ix0
        cols = (jax.lax.broadcasted_iota(jnp.int32, (1, win_w), 1)
                + rx0).astype(jnp.float32)                              # (1, win_w)
        wx = jnp.sum(jnp.where(cols == ix0, 1.0 - fx, 0.0)
                     + jnp.where(cols == ix0 + 1.0, fx, 0.0),
                     axis=0, keepdims=True)                             # (1, win_w)

        w3 = (wy * wx)[:, :, None] * inv_area                           # (win_h, win_w, 1)

        cp.wait()
        f3 = fbuf[...].astype(jnp.float32)                              # (win_h, win_w, C)
        pooled = jnp.sum(f3 * w3, axis=(0, 1), keepdims=True)[0]        # (1, C)

        o_ref[...] = jnp.sum(pooled * wh_ref[...], axis=1, keepdims=True) + bh_ref[...]

    return kernel


def crop_and_classify(points, feats_bhwc, w_head, b_head):
    bsz, h, w, c = feats_bhwc.shape
    win_h, win_w = min(3, h), min(3, w)
    return pl.pallas_call(
        _make_crop_head_kernel(h, w),
        out_shape=jax.ShapeDtypeStruct((bsz, 1), jnp.float32),
        grid_spec=pltpu.PrefetchScalarGridSpec(
            num_scalar_prefetch=1,                           # points -> SMEM
            grid=(bsz,),
            in_specs=[pl.BlockSpec(memory_space=pl.ANY),     # features stay in HBM
                      pl.BlockSpec((1, c), lambda b, pts: (0, 0)),
                      pl.BlockSpec((1, 1), lambda b, pts: (0, 0))],
            out_specs=pl.BlockSpec((1, 1), lambda b, pts: (b, 0)),
            scratch_shapes=[pltpu.VMEM((win_h, win_w, c), jnp.bfloat16),
                            pltpu.SemaphoreType.DMA],
        ),
        compiler_params=pltpu.CompilerParams(dimension_semantics=("parallel",)),
    )(points, feats_bhwc, w_head, b_head)


# ----------------------------------------------------------------------------
# Plain-JAX glue: im2col, parameter init, forward wrapper, f32 reference
# ----------------------------------------------------------------------------
def im2col(x):
    # x: NCHW (B, Cin, H, W) -> (B*h*w, Cin*16*16), patch flattened as (c, u, v)
    bsz, cin, hh, ww = x.shape
    h, w = hh // STRIDE, ww // STRIDE
    p = x.reshape(bsz, cin, h, STRIDE, w, STRIDE)
    p = p.transpose(0, 2, 4, 1, 3, 5)
    return p.reshape(bsz * h * w, cin * STRIDE * STRIDE), (bsz, h, w)


def bilinear_matrix(n_in, n_out):
    # align_corners=True interpolation matrix (n_out, n_in) -- reference path only
    if n_in == 1:
        return jnp.ones((n_out, 1), jnp.float32)
    src = jnp.arange(n_out, dtype=jnp.float32) * (n_in - 1) / (n_out - 1)
    i0 = jnp.clip(jnp.floor(src).astype(jnp.int32), 0, n_in - 2)
    w1 = src - i0.astype(jnp.float32)
    w0 = 1.0 - w1
    a = jnp.zeros((n_out, n_in), jnp.float32)
    rows = jnp.arange(n_out)
    a = a.at[rows, i0].add(w0)
    a = a.at[rows, i0 + 1].add(w1)
    return a


def init_params(key, n_channels):
    k1, k2, k3, k4, k5, k6, k7 = jax.random.split(key, 7)
    conv_w = 0.05 * jax.random.normal(k1, (FEAT_CH, n_channels, STRIDE, STRIDE), jnp.float32)
    gamma = 1.0 + 0.1 * jax.random.normal(k2, (FEAT_CH,), jnp.float32)
    beta = 0.1 * jax.random.normal(k3, (FEAT_CH,), jnp.float32)
    mean = 0.1 * jax.random.normal(k4, (FEAT_CH,), jnp.float32)
    var = 1.0 + jnp.abs(jax.random.normal(k5, (FEAT_CH,), jnp.float32))
    w_head = 0.05 * jax.random.normal(k6, (1, FEAT_CH), jnp.float32)
    b_head = 0.1 * jax.random.normal(k7, (1, 1), jnp.float32)
    eps = 1e-5
    scale = gamma / jnp.sqrt(var + eps)          # fold FrozenBatchNorm2d into affine
    bias = beta - mean * scale
    w_mat = conv_w.reshape(FEAT_CH, n_channels * STRIDE * STRIDE).T
    return dict(
        w_mat=w_mat,                              # f32 (reference path)
        w_mat_bf16=w_mat.astype(jnp.bfloat16),    # pre-cast once for the kernel path
        scale=scale.reshape(1, FEAT_CH),
        bias=bias.reshape(1, FEAT_CH),
        w_head=w_head,
        b_head=b_head,
    )


def core_conv_crop_forward(imgs, points, params):
    bsz = imgs.shape[0]
    # bf16 patches: the im2col transpose materializes half the bytes; MXU runs bf16.
    patches, (_, h, w) = im2col(imgs.astype(jnp.bfloat16))

    feats = feature_extractor(patches, params["w_mat_bf16"],
                              params["scale"], params["bias"])        # (B*h*w, C) bf16
    feats_bhwc = feats.reshape(bsz, h, w, FEAT_CH)                    # free, channels-last

    logits = crop_and_classify(points.astype(jnp.int32), feats_bhwc,
                               params["w_head"], params["b_head"])    # (B, 1)
    return logits, bsz


def reference_forward(imgs, points, params):
    # Unfused f32 reference of the assumed semantics: conv -> x16 bilinear upsample
    # -> 8x8 crop at point -> GAP -> Linear(1024, 1).
    bsz, _, _, _ = imgs.shape
    patches, (_, h, w) = im2col(imgs)
    feats = jnp.maximum(patches @ params["w_mat"] * params["scale"] + params["bias"], 0.0)
    feats = feats.reshape(bsz, h, w, FEAT_CH).transpose(0, 3, 1, 2)
    h_out, w_out = h * STRIDE, w * STRIDE
    a_h = bilinear_matrix(h, h_out)
    a_w = bilinear_matrix(w, w_out)
    up = jnp.einsum("Hh,bchw,Ww->bcHW", a_h, feats, a_w)
    logits = []
    for i in range(bsz):
        y0 = int(jnp.clip(points[i, 0] - CROP // 2, 0, h_out - CROP))
        x0 = int(jnp.clip(points[i, 1] - CROP // 2, 0, w_out - CROP))
        patch = up[i, :, y0:y0 + CROP, x0:x0 + CROP]
        pooled = patch.mean(axis=(1, 2))
        logits.append(pooled @ params["w_head"][0] + params["b_head"][0, 0])
    return jnp.stack(logits).reshape(bsz, 1)


if __name__ == "__main__":
    key = jax.random.PRNGKey(0)
    kp, kx, kpt = jax.random.split(key, 3)

    B, Cin, H, W = 2, 1, 32, 32          # n_channels=1 default; upsampled map is 32x32
    params = init_params(kp, Cin)
    imgs = jax.random.normal(kx, (B, Cin, H, W), jnp.float32)
    points = jax.random.randint(kpt, (B, 2), 0, H, dtype=jnp.int32)   # (y, x) per image

    logits, length = core_conv_crop_forward(imgs, points, params)
    logits = jax.block_until_ready(logits)

    ref = reference_forward(imgs, points, params)
    assert logits.shape == (B, 1) and length == B
    # bf16 MXU operands + bf16 feature storage vs pure-f32 reference -> loose tolerance.
    assert jnp.allclose(logits, ref, rtol=2e-2, atol=2e-2), (logits, ref)
    print("KERNEL_OK")
</pallas_src>

<mosaic_0001>
module attributes {stable_mosaic.version = 11 : i64} {
  func.func @_feat_kernel(%arg0: i32, %arg1: memref<8x256xbf16, #tpu.memory_space<vmem>>, %arg2: memref<256x1024xbf16, #tpu.memory_space<vmem>>, %arg3: memref<1x1024xf32, #tpu.memory_space<vmem>>, %arg4: memref<1x1024xf32, #tpu.memory_space<vmem>>, %arg5: memref<8x1024xbf16, #tpu.memory_space<vmem>>) attributes {dimension_semantics = [#tpu.dimension_semantics<parallel>], iteration_bounds = array<i64: 1>, scalar_prefetch = 0 : i64, scratch_operands = 0 : i64, tpu.core_type = #tpu.core_type<tc>, window_params = [{transform_indices = @transform_0, window_bounds = array<i64: 8, 256>}, {pipeline_mode = #tpu.pipeline_mode<synchronous>, transform_indices = @transform_1, window_bounds = array<i64: 256, 1024>}, {pipeline_mode = #tpu.pipeline_mode<synchronous>, transform_indices = @transform_2, window_bounds = array<i64: 1, 1024>}, {pipeline_mode = #tpu.pipeline_mode<synchronous>, transform_indices = @transform_3, window_bounds = array<i64: 1, 1024>}, {transform_indices = @transform_4, window_bounds = array<i64: 8, 1024>}]} {
    %c0 = arith.constant 0 : index
    %c0_0 = arith.constant 0 : index
    %0 = vector.load %arg1[%c0, %c0_0] : memref<8x256xbf16, #tpu.memory_space<vmem>>, vector<8x256xbf16>
    %c0_1 = arith.constant 0 : index
    %c0_2 = arith.constant 0 : index
    %1 = vector.load %arg2[%c0_1, %c0_2] : memref<256x1024xbf16, #tpu.memory_space<vmem>>, vector<256x1024xbf16>
    %cst = arith.constant dense<0.000000e+00> : vector<8x1024xf32>
    %2 = tpu.matmul %0, %1, %cst {dimension_numbers = #tpu.dot_dimension_numbers<[1], [0], [0], [1], [0, 0, 1, 1], [], []>} : vector<8x256xbf16>, vector<256x1024xbf16>, vector<8x1024xf32> -> vector<8x1024xf32>
    %c0_3 = arith.constant 0 : index
    %c0_4 = arith.constant 0 : index
    %3 = vector.load %arg3[%c0_3, %c0_4] : memref<1x1024xf32, #tpu.memory_space<vmem>>, vector<1x1024xf32>
    %4 = vector.broadcast %3 : vector<1x1024xf32> to vector<8x1024xf32>
    %5 = arith.mulf %2, %4 : vector<8x1024xf32>
    %c0_5 = arith.constant 0 : index
    %c0_6 = arith.constant 0 : index
    %6 = vector.load %arg4[%c0_5, %c0_6] : memref<1x1024xf32, #tpu.memory_space<vmem>>, vector<1x1024xf32>
    %7 = vector.broadcast %6 : vector<1x1024xf32> to vector<8x1024xf32>
    %8 = arith.addf %5, %7 : vector<8x1024xf32>
    %cst_7 = arith.constant 0.000000e+00 : f32
    %9 = vector.broadcast %cst_7 : f32 to vector<8x1024xf32>
    %10 = arith.maximumf %8, %9 : vector<8x1024xf32>
    %11 = arith.truncf %10 : vector<8x1024xf32> to vector<8x1024xbf16>
    %c0_8 = arith.constant 0 : index
    %c0_9 = arith.constant 0 : index
    %12 = vector.load %arg5[%c0_8, %c0_9] : memref<8x1024xbf16, #tpu.memory_space<vmem>>, vector<8x1024xbf16>
    tpu.vector_store %arg5[%c0_8, %c0_9], %11 {strides = array<i32>} : memref<8x1024xbf16, #tpu.memory_space<vmem>>, vector<8x1024xbf16>,
    return
  }
  func.func @transform_0(%arg0: i32) -> (i32, i32) {
    %c0_i32 = arith.constant 0 : i32
    %c0_i32_0 = arith.constant 0 : i32
    return %arg0, %c0_i32 : i32, i32
  }
  func.func @transform_1(%arg0: i32) -> (i32, i32) {
    %c0_i32 = arith.constant 0 : i32
    %c0_i32_0 = arith.constant 0 : i32
    %c0_i32_1 = arith.constant 0 : i32
    return %c0_i32, %c0_i32_0 : i32, i32
  }
  func.func @transform_2(%arg0: i32) -> (i32, i32) {
    %c0_i32 = arith.constant 0 : i32
    %c0_i32_0 = arith.constant 0 : i32
    %c0_i32_1 = arith.constant 0 : i32
    return %c0_i32, %c0_i32_0 : i32, i32
  }
  func.func @transform_3(%arg0: i32) -> (i32, i32) {
    %c0_i32 = arith.constant 0 : i32
    %c0_i32_0 = arith.constant 0 : i32
    %c0_i32_1 = arith.constant 0 : i32
    return %c0_i32, %c0_i32_0 : i32, i32
  }
  func.func @transform_4(%arg0: i32) -> (i32, i32) {
    %c0_i32 = arith.constant 0 : i32
    %c0_i32_0 = arith.constant 0 : i32
    return %arg0, %c0_i32 : i32, i32
  }
}

</mosaic_0001>

<llo_original>
// kernel: tpu_custom_call.1
$region0: #{tpu_custom_call.1}
  #allocation0 [shape = 'u32[]', space=smem, size = 0x4, offset = 0x4, fixed_abs, tag = 'smem constant byte address 0x4 - core index']
  #allocation1 [shape = 'u32[144,128]{1,0:T(1,128)}', space=vmem, size = 0x12000, scoped, tag = 'internal scratch']
  %s0 = inlined_call_operand.hbm [shape: bf16[8,256], index: 0, kind: input, shape index: {}]
  %s1 = inlined_call_operand.hbm [shape: bf16[256,1024], index: 1, kind: input, shape index: {}]
  %s2 = inlined_call_operand.hbm [shape: f32[1,1024], index: 2, kind: input, shape index: {}]
  %s3 = inlined_call_operand.vmem [shape: f32[1,1024], index: 3, kind: input, shape index: {}]
  %s4 = inlined_call_operand.hbm [shape: bf16[8,1024], index: 4, kind: output, shape index: {}]
  %s5 = sld [smem:[#allocation0]]
  $region38: #{tpu_custom_call.1} parent=0
    _
  %s7 = ssub.s32 1, %s5
  %s8 = scalar_select 0, %s7, %s5
  $region1: #{tpu_custom_call.1} parent=0
    #allocation2 [shape = 'u8[4096]{0}', space=vmem, size = 0x1000, scoped, tag = 'input window, operand 0, single buffered']
    #allocation3 [shape = 's32[1]{0}', space=sflag, size = 0x4, scoped, tag = 'scoped memory for tpu_custom_call.1']
    #allocation4 [shape = 's32[1]{0}', space=sflag, size = 0x4, scoped, tag = 'scoped memory for tpu_custom_call.1']
    #allocation5 [shape = 'u8[524288]{0}', space=vmem, size = 0x80000, scoped, tag = 'input window, operand 1, single buffered']
    #allocation6 [shape = 's32[1]{0}', space=sflag, size = 0x4, scoped, tag = 'scoped memory for tpu_custom_call.1']
    #allocation7 [shape = 'u8[4096]{0}', space=vmem, size = 0x1000, scoped, tag = 'input window, operand 2, single buffered']
    #allocation8 [shape = 'u8[16384]{0}', space=vmem, size = 0x4000, scoped, tag = 'output window, operand 0, single buffered']
    %9 = vsyncpa [#allocation3], 0
    %10 = vsyncpa [#allocation6], 0
    %11 = vsyncpa [#allocation4], 0
    // Predicated region
    $region2: #{tpu_custom_call.1} parent=1 // pred_check
      _
    $region3: #{tpu_custom_call.1} parent=1 // pred_check_branch
      %13 = sbr.rel (0) target = $region5
    $region4: #{tpu_custom_call.1} parent=1 // pred_region
      %s15 = ssub.s32 128, 128
      %16 = vsyncadd [#allocation3], %s15
      %s18 = sshll.u32 [#allocation2], 4
      %s19 = int_to_ptr.vmem [resolvable:$true] %s18
      %21 = dma.hbm_to_vmem [thread:$0]  %s0, 128, %s19, [#allocation3]
    $region5: #{tpu_custom_call.1} parent=1 // pred_fallthru
      _
    // Predicated region
    $region6: #{tpu_custom_call.1} parent=1 // pred_check
      _
    $region7: #{tpu_custom_call.1} parent=1 // pred_check_branch
      %23 = sbr.rel (0) target = $region9
    $region8: #{tpu_custom_call.1} parent=1 // pred_region
      %s25 = ssub.s32 16384, 16384
      %26 = vsyncadd [#allocation6], %s25
      %s27 = sshll.u32 [#allocation5], 4
      %s28 = int_to_ptr.vmem [resolvable:$true] %s27
      %33 = dma.hbm_to_vmem [thread:$0]  %s1, 16384, %s28, [#allocation6], 512, 512, 32
    $region9: #{tpu_custom_call.1} parent=1 // pred_fallthru
      _
    // Predicated region
    $region10: #{tpu_custom_call.1} parent=1 // pred_check
      _
    $region11: #{tpu_custom_call.1} parent=1 // pred_check_branch
      %35 = sbr.rel (0) target = $region13
    $region12: #{tpu_custom_call.1} parent=1 // pred_region
      %s37 = ssub.s32 128, 128
      %38 = vsyncadd [#allocation6], %s37
      %s40 = sshll.u32 [#allocation7], 4
      %s41 = int_to_ptr.vmem [resolvable:$true] %s40
      %43 = dma.hbm_to_vmem [thread:$0]  %s2, 128, %s41, [#allocation6]
    $region13: #{tpu_custom_call.1} parent=1 // pred_fallthru
      _
    // Predicated region
    $region14: #{tpu_custom_call.1} parent=1 // pred_check
      _
    $region15: #{tpu_custom_call.1} parent=1 // pred_check_branch
      %45 = sbr.rel (0) target = $region17
    $region16: #{tpu_custom_call.1} parent=1 // pred_region
      _
    $region17: #{tpu_custom_call.1} parent=1 // pred_fallthru
      _
    // Predicated region
    $region18: #{tpu_custom_call.1} parent=1 // pred_check
      _
    $region19: #{tpu_custom_call.1} parent=1 // pred_check_branch
      %47 = sbr.rel (0) target = $region21
    $region20: #{tpu_custom_call.1} parent=1 // pred_region
      %48 = dma.done [#allocation3], 128
    $region21: #{tpu_custom_call.1} parent=1 // pred_fallthru
      _
    // Predicated region
    $region22: #{tpu_custom_call.1} parent=1 // pred_check
      _
    $region23: #{tpu_custom_call.1} parent=1 // pred_check_branch
      %50 = sbr.rel (0) target = $region25
    $region24: #{tpu_custom_call.1} parent=1 // pred_region
      %51 = dma.done [#allocation6], 16384
    $region25: #{tpu_custom_call.1} parent=1 // pred_fallthru
      _
    // Predicated region
    $region26: #{tpu_custom_call.1} parent=1 // pred_check
      _
    $region27: #{tpu_custom_call.1} parent=1 // pred_check_branch
      %53 = sbr.rel (0) target = $region29
    $region28: #{tpu_custom_call.1} parent=1 // pred_region
      %54 = dma.done [#allocation6], 128
    $region29: #{tpu_custom_call.1} parent=1 // pred_fallthru
      _
    %v55 = vld [vmem:[#allocation2] sm:$0xff]
    %v56 = vld [vmem:[#allocation5] sm:$0xff]
    %v57 = vld [vmem:[#allocation5 + $0x8] sm:$0xff]
    %v58 = vld [vmem:[#allocation5 + $0x10] sm:$0xff]
    %v59 = vld [vmem:[#allocation5 + $0x18] sm:$0xff]
    %v60 = vld [vmem:[#allocation5 + $0x20] sm:$0xff]
    %v61 = vld [vmem:[#allocation5 + $0x28] sm:$0xff]
    %v62 = vld [vmem:[#allocation5 + $0x30] sm:$0xff]
    %v63 = vld [vmem:[#allocation5 + $0x38] sm:$0xff]
    %v64 = vld [vmem:[#allocation5 + $0x40] sm:$0xff]
    %v65 = vld [vmem:[#allocation5 + $0x48] sm:$0xff]
    %v66 = vld [vmem:[#allocation5 + $0x50] sm:$0xff]
    %v67 = vld [vmem:[#allocation5 + $0x58] sm:$0xff]
    %v68 = vld [vmem:[#allocation5 + $0x60] sm:$0xff]
    %v69 = vld [vmem:[#allocation5 + $0x68] sm:$0xff]
    %v70 = vld [vmem:[#allocation5 + $0x70] sm:$0xff]
    %v71 = vld [vmem:[#allocation5 + $0x78] sm:$0xff]
    %v72 = vld [vmem:[#allocation5 + $0x80] sm:$0xff]
    %v73 = vld [vmem:[#allocation5 + $0x88] sm:$0xff]
    %v74 = vld [vmem:[#allocation5 + $0x90] sm:$0xff]
    %v75 = vld [vmem:[#allocation5 + $0x98] sm:$0xff]
    %v76 = vld [vmem:[#allocation5 + $0xa0] sm:$0xff]
    %v77 = vld [vmem:[#allocation5 + $0xa8] sm:$0xff]
    %v78 = vld [vmem:[#allocation5 + $0xb0] sm:$0xff]
    %v79 = vld [vmem:[#allocation5 + $0xb8] sm:$0xff]
    %v80 = vld [vmem:[#allocation5 + $0xc0] sm:$0xff]
    %v81 = vld [vmem:[#allocation5 + $0xc8] sm:$0xff]
    %v82 = vld [vmem:[#allocation5 + $0xd0] sm:$0xff]
    %v83 = vld [vmem:[#allocation5 + $0xd8] sm:$0xff]
    %v84 = vld [vmem:[#allocation5 + $0xe0] sm:$0xff]
    %v85 = vld [vmem:[#allocation5 + $0xe8] sm:$0xff]
    %v86 = vld [vmem:[#allocation5 + $0xf0] sm:$0xff]
    %v87 = vld [vmem:[#allocation5 + $0xf8] sm:$0xff]
    %v88 = vld [vmem:[#allocation5 + $0x100] sm:$0xff]
    %v89 = vld [vmem:[#allocation5 + $0x108] sm:$0xff]
    %v90 = vld [vmem:[#allocation5 + $0x110] sm:$0xff]
    %v91 = vld [vmem:[#allocation5 + $0x118] sm:$0xff]
    %v92 = vld [vmem:[#allocation5 + $0x120] sm:$0xff]
    %v93 = vld [vmem:[#allocation5 + $0x128] sm:$0xff]
    %v94 = vld [vmem:[#allocation5 + $0x130] sm:$0xff]
    %v95 = vld [vmem:[#allocation5 + $0x138] sm:$0xff]
    %v96 = vld [vmem:[#allocation5 + $0x140] sm:$0xff]
    %v97 = vld [vmem:[#allocation5 + $0x148] sm:$0xff]
    %v98 = vld [vmem:[#allocation5 + $0x150] sm:$0xff]
    %v99 = vld [vmem:[#allocation5 + $0x158] sm:$0xff]
    %v100 = vld [vmem:[#allocation5 + $0x160] sm:$0xff]
    %v101 = vld [vmem:[#allocation5 + $0x168] sm:$0xff]
    %v102 = vld [vmem:[#allocation5 + $0x170] sm:$0xff]
    %v103 = vld [vmem:[#allocation5 + $0x178] sm:$0xff]
    %v104 = vld [vmem:[#allocation5 + $0x180] sm:$0xff]
    %v105 = vld [vmem:[#allocation5 + $0x188] sm:$0xff]
    %v106 = vld [vmem:[#allocation5 + $0x190] sm:$0xff]
    %v107 = vld [vmem:[#allocation5 + $0x198] sm:$0xff]
    %v108 = vld [vmem:[#allocation5 + $0x1a0] sm:$0xff]
    %v109 = vld [vmem:[#allocation5 + $0x1a8] sm:$0xff]
    %v110 = vld [vmem:[#allocation5 + $0x1b0] sm:$0xff]
    %v111 = vld [vmem:[#allocation5 + $0x1b8] sm:$0xff]
    %v112 = vld [vmem:[#allocation5 + $0x1c0] sm:$0xff]
    %v113 = vld [vmem:[#allocation5 + $0x1c8] sm:$0xff]
    %v114 = vld [vmem:[#allocation5 + $0x1d0] sm:$0xff]
    %v115 = vld [vmem:[#allocation5 + $0x1d8] sm:$0xff]
    %v116 = vld [vmem:[#allocation5 + $0x1e0] sm:$0xff]
    %v117 = vld [vmem:[#allocation5 + $0x1e8] sm:$0xff]
    %v118 = vld [vmem:[#allocation5 + $0x1f0] sm:$0xff]
    %v119 = vld [vmem:[#allocation5 + $0x1f8] sm:$0xff]
    %v120 = vld [vmem:[#allocation5 + $0x200] sm:$0xff]
    %v121 = vld [vmem:[#allocation5 + $0x208] sm:$0xff]
    %v122 = vld [vmem:[#allocation5 + $0x210] sm:$0xff]
    %v123 = vld [vmem:[#allocation5 + $0x218] sm:$0xff]
    %v124 = vld [vmem:[#allocation5 + $0x220] sm:$0xff]
    %v125 = vld [vmem:[#allocation5 + $0x228] sm:$0xff]
    %v126 = vld [vmem:[#allocation5 + $0x230] sm:$0xff]
    %v127 = vld [vmem:[#allocation5 + $0x238] sm:$0xff]
    %v128 = vld [vmem:[#allocation5 + $0x240] sm:$0xff]
    %v129 = vld [vmem:[#allocation5 + $0x248] sm:$0xff]
    %v130 = vld [vmem:[#allocation5 + $0x250] sm:$0xff]
    %v131 = vld [vmem:[#allocation5 + $0x258] sm:$0xff]
    %v132 = vld [vmem:[#allocation5 + $0x260] sm:$0xff]
    %v133 = vld [vmem:[#allocation5 + $0x268] sm:$0xff]
    %v134 = vld [vmem:[#allocation5 + $0x270] sm:$0xff]
    %v135 = vld [vmem:[#allocation5 + $0x278] sm:$0xff]
    %v136 = vld [vmem:[#allocation5 + $0x280] sm:$0xff]
    %v137 = vld [vmem:[#allocation5 + $0x288] sm:$0xff]
    %v138 = vld [vmem:[#allocation5 + $0x290] sm:$0xff]
    %v139 = vld [vmem:[#allocation5 + $0x298] sm:$0xff]
    %v140 = vld [vmem:[#allocation5 + $0x2a0] sm:$0xff]
    %v141 = vld [vmem:[#allocation5 + $0x2a8] sm:$0xff]
    %v142 = vld [vmem:[#allocation5 + $0x2b0] sm:$0xff]
    %v143 = vld [vmem:[#allocation5 + $0x2b8] sm:$0xff]
    %v144 = vld [vmem:[#allocation5 + $0x2c0] sm:$0xff]
    %v145 = vld [vmem:[#allocation5 + $0x2c8] sm:$0xff]
    %v146 = vld [vmem:[#allocation5 + $0x2d0] sm:$0xff]
    %v147 = vld [vmem:[#allocation5 + $0x2d8] sm:$0xff]
    %v148 = vld [vmem:[#allocation5 + $0x2e0] sm:$0xff]
    %v149 = vld [vmem:[#allocation5 + $0x2e8] sm:$0xff]
    %v150 = vld [vmem:[#allocation5 + $0x2f0] sm:$0xff]
    %v151 = vld [vmem:[#allocation5 + $0x2f8] sm:$0xff]
    %v152 = vld [vmem:[#allocation5 + $0x300] sm:$0xff]
    %v153 = vld [vmem:[#allocation5 + $0x308] sm:$0xff]
    %v154 = vld [vmem:[#allocation5 + $0x310] sm:$0xff]
    %v155 = vld [vmem:[#allocation5 + $0x318] sm:$0xff]
    %v156 = vld [vmem:[#allocation5 + $0x320] sm:$0xff]
    %v157 = vld [vmem:[#allocation5 + $0x328] sm:$0xff]
    %v158 = vld [vmem:[#allocation5 + $0x330] sm:$0xff]
    %v159 = vld [vmem:[#allocation5 + $0x338] sm:$0xff]
    %v160 = vld [vmem:[#allocation5 + $0x340] sm:$0xff]
    %v161 = vld [vmem:[#allocation5 + $0x348] sm:$0xff]
    %v162 = vld [vmem:[#allocation5 + $0x350] sm:$0xff]
    %v163 = vld [vmem:[#allocation5 + $0x358] sm:$0xff]
    %v164 = vld [vmem:[#allocation5 + $0x360] sm:$0xff]
    %v165 = vld [vmem:[#allocation5 + $0x368] sm:$0xff]
    %v166 = vld [vmem:[#allocation5 + $0x370] sm:$0xff]
    %v167 = vld [vmem:[#allocation5 + $0x378] sm:$0xff]
    %v168 = vld [vmem:[#allocation5 + $0x380] sm:$0xff]
    %v169 = vld [vmem:[#allocation5 + $0x388] sm:$0xff]
    %v170 = vld [vmem:[#allocation5 + $0x390] sm:$0xff]
    %v171 = vld [vmem:[#allocation5 + $0x398] sm:$0xff]
    %v172 = vld [vmem:[#allocation5 + $0x3a0] sm:$0xff]
    %v173 = vld [vmem:[#allocation5 + $0x3a8] sm:$0xff]
    %v174 = vld [vmem:[#allocation5 + $0x3b0] sm:$0xff]
    %v175 = vld [vmem:[#allocation5 + $0x3b8] sm:$0xff]
    %v176 = vld [vmem:[#allocation5 + $0x3c0] sm:$0xff]
    %v177 = vld [vmem:[#allocation5 + $0x3c8] sm:$0xff]
    %v178 = vld [vmem:[#allocation5 + $0x3d0] sm:$0xff]
    %v179 = vld [vmem:[#allocation5 + $0x3d8] sm:$0xff]
    %v180 = vld [vmem:[#allocation5 + $0x3e0] sm:$0xff]
    %v181 = vld [vmem:[#allocation5 + $0x3e8] sm:$0xff]
    %v182 = vld [vmem:[#allocation5 + $0x3f0] sm:$0xff]
    %v183 = vld [vmem:[#allocation5 + $0x3f8] sm:$0xff]
    %v185 = vunpack.c.l.b16 %v55
    %v186 = vunpack.c.h.b16 %v55
    %v187 = vpack.c.b16 %v185, %v185
    %v188 = vpack.c.b16 %v186, %v186
    %v319 = vunpack.c.l.b16 %v56
    %v320 = vunpack.c.h.b16 %v56
    %v321 = vunpack.c.l.b16 %v57
    %v322 = vunpack.c.h.b16 %v57
    %v323 = vunpack.c.l.b16 %v58
    %v324 = vunpack.c.h.b16 %v58
    %v325 = vunpack.c.l.b16 %v59
    %v326 = vunpack.c.h.b16 %v59
    %v327 = vunpack.c.l.b16 %v60
    %v328 = vunpack.c.h.b16 %v60
    %v329 = vunpack.c.l.b16 %v61
    %v330 = vunpack.c.h.b16 %v61
    %v331 = vunpack.c.l.b16 %v62
    %v332 = vunpack.c.h.b16 %v62
    %v333 = vunpack.c.l.b16 %v63
    %v334 = vunpack.c.h.b16 %v63
    %v335 = vunpack.c.l.b16 %v64
    %v336 = vunpack.c.h.b16 %v64
    %v337 = vunpack.c.l.b16 %v65
    %v338 = vunpack.c.h.b16 %v65
    %v339 = vunpack.c.l.b16 %v66
    %v340 = vunpack.c.h.b16 %v66
    %v341 = vunpack.c.l.b16 %v67
    %v342 = vunpack.c.h.b16 %v67
    %v343 = vunpack.c.l.b16 %v68
    %v344 = vunpack.c.h.b16 %v68
    %v345 = vunpack.c.l.b16 %v69
    %v346 = vunpack.c.h.b16 %v69
    %v347 = vunpack.c.l.b16 %v70
    %v348 = vunpack.c.h.b16 %v70
    %v349 = vunpack.c.l.b16 %v71
    %v350 = vunpack.c.h.b16 %v71
    %v351 = vunpack.c.l.b16 %v72
    %v352 = vunpack.c.h.b16 %v72
    %v353 = vunpack.c.l.b16 %v73
    %v354 = vunpack.c.h.b16 %v73
    %v355 = vunpack.c.l.b16 %v74
    %v356 = vunpack.c.h.b16 %v74
    %v357 = vunpack.c.l.b16 %v75
    %v358 = vunpack.c.h.b16 %v75
    %v359 = vunpack.c.l.b16 %v76
    %v360 = vunpack.c.h.b16 %v76
    %v361 = vunpack.c.l.b16 %v77
    %v362 = vunpack.c.h.b16 %v77
    %v363 = vunpack.c.l.b16 %v78
    %v364 = vunpack.c.h.b16 %v78
    %v365 = vunpack.c.l.b16 %v79
    %v366 = vunpack.c.h.b16 %v79
    %v367 = vunpack.c.l.b16 %v80
    %v368 = vunpack.c.h.b16 %v80
    %v369 = vunpack.c.l.b16 %v81
    %v370 = vunpack.c.h.b16 %v81
    %v371 = vunpack.c.l.b16 %v82
    %v372 = vunpack.c.h.b16 %v82
    %v373 = vunpack.c.l.b16 %v83
    %v374 = vunpack.c.h.b16 %v83
    %v375 = vunpack.c.l.b16 %v84
    %v376 = vunpack.c.h.b16 %v84
    %v377 = vunpack.c.l.b16 %v85
    %v378 = vunpack.c.h.b16 %v85
    %v379 = vunpack.c.l.b16 %v86
    %v380 = vunpack.c.h.b16 %v86
    %v381 = vunpack.c.l.b16 %v87
    %v382 = vunpack.c.h.b16 %v87
    %v383 = vunpack.c.l.b16 %v88
    %v384 = vunpack.c.h.b16 %v88
    %v385 = vunpack.c.l.b16 %v89
    %v386 = vunpack.c.h.b16 %v89
    %v387 = vunpack.c.l.b16 %v90
    %v388 = vunpack.c.h.b16 %v90
    %v389 = vunpack.c.l.b16 %v91
    %v390 = vunpack.c.h.b16 %v91
    %v391 = vunpack.c.l.b16 %v92
    %v392 = vunpack.c.h.b16 %v92
    %v393 = vunpack.c.l.b16 %v93
    %v394 = vunpack.c.h.b16 %v93
    %v395 = vunpack.c.l.b16 %v94
    %v396 = vunpack.c.h.b16 %v94
    %v397 = vunpack.c.l.b16 %v95
    %v398 = vunpack.c.h.b16 %v95
    %v399 = vunpack.c.l.b16 %v96
    %v400 = vunpack.c.h.b16 %v96
    %v401 = vunpack.c.l.b16 %v97
    %v402 = vunpack.c.h.b16 %v97
    %v403 = vunpack.c.l.b16 %v98
    %v404 = vunpack.c.h.b16 %v98
    %v405 = vunpack.c.l.b16 %v99
    %v406 = vunpack.c.h.b16 %v99
    %v407 = vunpack.c.l.b16 %v100
    %v408 = vunpack.c.h.b16 %v100
    %v409 = vunpack.c.l.b16 %v101
    %v410 = vunpack.c.h.b16 %v101
    %v411 = vunpack.c.l.b16 %v102
    %v412 = vunpack.c.h.b16 %v102
    %v413 = vunpack.c.l.b16 %v103
    %v414 = vunpack.c.h.b16 %v103
    %v415 = vunpack.c.l.b16 %v104
    %v416 = vunpack.c.h.b16 %v104
    %v417 = vunpack.c.l.b16 %v105
    %v418 = vunpack.c.h.b16 %v105
    %v419 = vunpack.c.l.b16 %v106
    %v420 = vunpack.c.h.b16 %v106
    %v421 = vunpack.c.l.b16 %v107
    %v422 = vunpack.c.h.b16 %v107
    %v423 = vunpack.c.l.b16 %v108
    %v424 = vunpack.c.h.b16 %v108
    %v425 = vunpack.c.l.b16 %v109
    %v426 = vunpack.c.h.b16 %v109
    %v427 = vunpack.c.l.b16 %v110
    %v428 = vunpack.c.h.b16 %v110
    %v429 = vunpack.c.l.b16 %v111
    %v430 = vunpack.c.h.b16 %v111
    %v431 = vunpack.c.l.b16 %v112
    %v432 = vunpack.c.h.b16 %v112
    %v433 = vunpack.c.l.b16 %v113
    %v434 = vunpack.c.h.b16 %v113
    %v435 = vunpack.c.l.b16 %v114
    %v436 = vunpack.c.h.b16 %v114
    %v437 = vunpack.c.l.b16 %v115
    %v438 = vunpack.c.h.b16 %v115
    %v439 = vunpack.c.l.b16 %v116
    %v440 = vunpack.c.h.b16 %v116
    %v441 = vunpack.c.l.b16 %v117
    %v442 = vunpack.c.h.b16 %v117
    %v443 = vunpack.c.l.b16 %v118
    %v444 = vunpack.c.h.b16 %v118
    %v445 = vunpack.c.l.b16 %v119
    %v446 = vunpack.c.h.b16 %v119
    %v447 = vunpack.c.l.b16 %v120
    %v448 = vunpack.c.h.b16 %v120
    %v449 = vunpack.c.l.b16 %v121
    %v450 = vunpack.c.h.b16 %v121
    %v451 = vunpack.c.l.b16 %v122
    %v452 = vunpack.c.h.b16 %v122
    %v453 = vunpack.c.l.b16 %v123
    %v454 = vunpack.c.h.b16 %v123
    %v455 = vunpack.c.l.b16 %v124
    %v456 = vunpack.c.h.b16 %v124
    %v457 = vunpack.c.l.b16 %v125
    %v458 = vunpack.c.h.b16 %v125
    %v459 = vunpack.c.l.b16 %v126
    %v460 = vunpack.c.h.b16 %v126
    %v461 = vunpack.c.l.b16 %v127
    %v462 = vunpack.c.h.b16 %v127
    %v463 = vunpack.c.l.b16 %v128
    %v464 = vunpack.c.h.b16 %v128
    %v465 = vunpack.c.l.b16 %v129
    %v466 = vunpack.c.h.b16 %v129
    %v467 = vunpack.c.l.b16 %v130
    %v468 = vunpack.c.h.b16 %v130
    %v469 = vunpack.c.l.b16 %v131
    %v470 = vunpack.c.h.b16 %v131
    %v471 = vunpack.c.l.b16 %v132
    %v472 = vunpack.c.h.b16 %v132
    %v473 = vunpack.c.l.b16 %v133
    %v474 = vunpack.c.h.b16 %v133
    %v475 = vunpack.c.l.b16 %v134
    %v476 = vunpack.c.h.b16 %v134
    %v477 = vunpack.c.l.b16 %v135
    %v478 = vunpack.c.h.b16 %v135
    %v479 = vunpack.c.l.b16 %v136
    %v480 = vunpack.c.h.b16 %v136
    %v481 = vunpack.c.l.b16 %v137
    %v482 = vunpack.c.h.b16 %v137
    %v483 = vunpack.c.l.b16 %v138
    %v484 = vunpack.c.h.b16 %v138
    %v485 = vunpack.c.l.b16 %v139
    %v486 = vunpack.c.h.b16 %v139
    %v487 = vunpack.c.l.b16 %v140
    %v488 = vunpack.c.h.b16 %v140
    %v489 = vunpack.c.l.b16 %v141
    %v490 = vunpack.c.h.b16 %v141
    %v491 = vunpack.c.l.b16 %v142
    %v492 = vunpack.c.h.b16 %v142
    %v493 = vunpack.c.l.b16 %v143
    %v494 = vunpack.c.h.b16 %v143
    %v495 = vunpack.c.l.b16 %v144
    %v496 = vunpack.c.h.b16 %v144
    %v497 = vunpack.c.l.b16 %v145
    %v498 = vunpack.c.h.b16 %v145
    %v499 = vunpack.c.l.b16 %v146
    %v500 = vunpack.c.h.b16 %v146
    %v501 = vunpack.c.l.b16 %v147
    %v502 = vunpack.c.h.b16 %v147
    %v503 = vunpack.c.l.b16 %v148
    %v504 = vunpack.c.h.b16 %v148
    %v505 = vunpack.c.l.b16 %v149
    %v506 = vunpack.c.h.b16 %v149
    %v507 = vunpack.c.l.b16 %v150
    %v508 = vunpack.c.h.b16 %v150
    %v509 = vunpack.c.l.b16 %v151
    %v510 = vunpack.c.h.b16 %v151
    %v511 = vunpack.c.l.b16 %v152
    %v512 = vunpack.c.h.b16 %v152
    %v513 = vunpack.c.l.b16 %v153
    %v514 = vunpack.c.h.b16 %v153
    %v515 = vunpack.c.l.b16 %v154
    %v516 = vunpack.c.h.b16 %v154
    %v517 = vunpack.c.l.b16 %v155
    %v518 = vunpack.c.h.b16 %v155
    %v519 = vunpack.c.l.b16 %v156
    %v520 = vunpack.c.h.b16 %v156
    %v521 = vunpack.c.l.b16 %v157
    %v522 = vunpack.c.h.b16 %v157
    %v523 = vunpack.c.l.b16 %v158
    %v524 = vunpack.c.h.b16 %v158
    %v525 = vunpack.c.l.b16 %v159
    %v526 = vunpack.c.h.b16 %v159
    %v527 = vunpack.c.l.b16 %v160
    %v528 = vunpack.c.h.b16 %v160
    %v529 = vunpack.c.l.b16 %v161
    %v530 = vunpack.c.h.b16 %v161
    %v531 = vunpack.c.l.b16 %v162
    %v532 = vunpack.c.h.b16 %v162
    %v533 = vunpack.c.l.b16 %v163
    %v534 = vunpack.c.h.b16 %v163
    %v535 = vunpack.c.l.b16 %v164
    %v536 = vunpack.c.h.b16 %v164
    %v537 = vunpack.c.l.b16 %v165
    %v538 = vunpack.c.h.b16 %v165
    %v539 = vunpack.c.l.b16 %v166
    %v540 = vunpack.c.h.b16 %v166
    %v541 = vunpack.c.l.b16 %v167
    %v542 = vunpack.c.h.b16 %v167
    %v543 = vunpack.c.l.b16 %v168
    %v544 = vunpack.c.h.b16 %v168
    %v545 = vunpack.c.l.b16 %v169
    %v546 = vunpack.c.h.b16 %v169
    %v547 = vunpack.c.l.b16 %v170
    %v548 = vunpack.c.h.b16 %v170
    %v549 = vunpack.c.l.b16 %v171
    %v550 = vunpack.c.h.b16 %v171
    %v551 = vunpack.c.l.b16 %v172
    %v552 = vunpack.c.h.b16 %v172
    %v553 = vunpack.c.l.b16 %v173
    %v554 = vunpack.c.h.b16 %v173
    %v555 = vunpack.c.l.b16 %v174
    %v556 = vunpack.c.h.b16 %v174
    %v557 = vunpack.c.l.b16 %v175
    %v558 = vunpack.c.h.b16 %v175
    %v559 = vunpack.c.l.b16 %v176
    %v560 = vunpack.c.h.b16 %v176
    %v561 = vunpack.c.l.b16 %v177
    %v562 = vunpack.c.h.b16 %v177
    %v563 = vunpack.c.l.b16 %v178
    %v564 = vunpack.c.h.b16 %v178
    %v565 = vunpack.c.l.b16 %v179
    %v566 = vunpack.c.h.b16 %v179
    %v567 = vunpack.c.l.b16 %v180
    %v568 = vunpack.c.h.b16 %v180
    %v569 = vunpack.c.l.b16 %v181
    %v570 = vunpack.c.h.b16 %v181
    %v571 = vunpack.c.l.b16 %v182
    %v572 = vunpack.c.h.b16 %v182
    %v573 = vunpack.c.l.b16 %v183
    %v574 = vunpack.c.h.b16 %v183
    %v575 = vpack.c.b16 %v327, %v319
    %v576 = vpack.c.b16 %v328, %v320
    %v577 = vpack.c.b16 %v329, %v321
    %v578 = vpack.c.b16 %v330, %v322
    %v579 = vpack.c.b16 %v331, %v323
    %v580 = vpack.c.b16 %v332, %v324
    %v581 = vpack.c.b16 %v333, %v325
    %v582 = vpack.c.b16 %v334, %v326
    %v583 = vpack.c.b16 %v343, %v335
    %v584 = vpack.c.b16 %v344, %v336
    %v585 = vpack.c.b16 %v345, %v337
    %v586 = vpack.c.b16 %v346, %v338
    %v587 = vpack.c.b16 %v347, %v339
    %v588 = vpack.c.b16 %v348, %v340
    %v589 = vpack.c.b16 %v349, %v341
    %v590 = vpack.c.b16 %v350, %v342
    %v591 = vpack.c.b16 %v359, %v351
    %v592 = vpack.c.b16 %v360, %v352
    %v593 = vpack.c.b16 %v361, %v353
    %v594 = vpack.c.b16 %v362, %v354
    %v595 = vpack.c.b16 %v363, %v355
    %v596 = vpack.c.b16 %v364, %v356
    %v597 = vpack.c.b16 %v365, %v357
    %v598 = vpack.c.b16 %v366, %v358
    %v599 = vpack.c.b16 %v375, %v367
    %v600 = vpack.c.b16 %v376, %v368
    %v601 = vpack.c.b16 %v377, %v369
    %v602 = vpack.c.b16 %v378, %v370
    %v603 = vpack.c.b16 %v379, %v371
    %v604 = vpack.c.b16 %v380, %v372
    %v605 = vpack.c.b16 %v381, %v373
    %v606 = vpack.c.b16 %v382, %v374
    %v607 = vpack.c.b16 %v391, %v383
    %v608 = vpack.c.b16 %v392, %v384
    %v609 = vpack.c.b16 %v393, %v385
    %v610 = vpack.c.b16 %v394, %v386
    %v611 = vpack.c.b16 %v395, %v387
    %v612 = vpack.c.b16 %v396, %v388
    %v613 = vpack.c.b16 %v397, %v389
    %v614 = vpack.c.b16 %v398, %v390
    %v615 = vpack.c.b16 %v407, %v399
    %v616 = vpack.c.b16 %v408, %v400
    %v617 = vpack.c.b16 %v409, %v401
    %v618 = vpack.c.b16 %v410, %v402
    %v619 = vpack.c.b16 %v411, %v403
    %v620 = vpack.c.b16 %v412, %v404
    %v621 = vpack.c.b16 %v413, %v405
    %v622 = vpack.c.b16 %v414, %v406
    %v623 = vpack.c.b16 %v423, %v415
    %v624 = vpack.c.b16 %v424, %v416
    %v625 = vpack.c.b16 %v425, %v417
    %v626 = vpack.c.b16 %v426, %v418
    %v627 = vpack.c.b16 %v427, %v419
    %v628 = vpack.c.b16 %v428, %v420
    %v629 = vpack.c.b16 %v429, %v421
    %v630 = vpack.c.b16 %v430, %v422
    %v631 = vpack.c.b16 %v439, %v431
    %v632 = vpack.c.b16 %v440, %v432
    %v633 = vpack.c.b16 %v441, %v433
    %v634 = vpack.c.b16 %v442, %v434
    %v635 = vpack.c.b16 %v443, %v435
    %v636 = vpack.c.b16 %v444, %v436
    %v637 = vpack.c.b16 %v445, %v437
    %v638 = vpack.c.b16 %v446, %v438
    %v639 = vpack.c.b16 %v455, %v447
    %v640 = vpack.c.b16 %v456, %v448
    %v641 = vpack.c.b16 %v457, %v449
    %v642 = vpack.c.b16 %v458, %v450
    %v643 = vpack.c.b16 %v459, %v451
    %v644 = vpack.c.b16 %v460, %v452
    %v645 = vpack.c.b16 %v461, %v453
    %v646 = vpack.c.b16 %v462, %v454
    %v647 = vpack.c.b16 %v471, %v463
    %v648 = vpack.c.b16 %v472, %v464
    %v649 = vpack.c.b16 %v473, %v465
    %v650 = vpack.c.b16 %v474, %v466
    %v651 = vpack.c.b16 %v475, %v467
    %v652 = vpack.c.b16 %v476, %v468
    %v653 = vpack.c.b16 %v477, %v469
    %v654 = vpack.c.b16 %v478, %v470
    %v655 = vpack.c.b16 %v487, %v479
    %v656 = vpack.c.b16 %v488, %v480
    %v657 = vpack.c.b16 %v489, %v481
    %v658 = vpack.c.b16 %v490, %v482
    %v659 = vpack.c.b16 %v491, %v483
    %v660 = vpack.c.b16 %v492, %v484
    %v661 = vpack.c.b16 %v493, %v485
    %v662 = vpack.c.b16 %v494, %v486
    %v663 = vpack.c.b16 %v503, %v495
    %v664 = vpack.c.b16 %v504, %v496
    %v665 = vpack.c.b16 %v505, %v497
    %v666 = vpack.c.b16 %v506, %v498
    %v667 = vpack.c.b16 %v507, %v499
    %v668 = vpack.c.b16 %v508, %v500
    %v669 = vpack.c.b16 %v509, %v501
    %v670 = vpack.c.b16 %v510, %v502
    %v671 = vpack.c.b16 %v519, %v511
    %v672 = vpack.c.b16 %v520, %v512
    %v673 = vpack.c.b16 %v521, %v513
    %v674 = vpack.c.b16 %v522, %v514
    %v675 = vpack.c.b16 %v523, %v515
    %v676 = vpack.c.b16 %v524, %v516
    %v677 = vpack.c.b16 %v525, %v517
    %v678 = vpack.c.b16 %v526, %v518
    %v679 = vpack.c.b16 %v535, %v527
    %v680 = vpack.c.b16 %v536, %v528
    %v681 = vpack.c.b16 %v537, %v529
    %v682 = vpack.c.b16 %v538, %v530
    %v683 = vpack.c.b16 %v539, %v531
    %v684 = vpack.c.b16 %v540, %v532
    %v685 = vpack.c.b16 %v541, %v533
    %v686 = vpack.c.b16 %v542, %v534
    %v687 = vpack.c.b16 %v551, %v543
    %v688 = vpack.c.b16 %v552, %v544
    %v689 = vpack.c.b16 %v553, %v545
    %v690 = vpack.c.b16 %v554, %v546
    %v691 = vpack.c.b16 %v555, %v547
    %v692 = vpack.c.b16 %v556, %v548
    %v693 = vpack.c.b16 %v557, %v549
    %v694 = vpack.c.b16 %v558, %v550
    %v695 = vpack.c.b16 %v567, %v559
    %v696 = vpack.c.b16 %v568, %v560
    %v697 = vpack.c.b16 %v569, %v561
    %v698 = vpack.c.b16 %v570, %v562
    %v699 = vpack.c.b16 %v571, %v563
    %v700 = vpack.c.b16 %v572, %v564
    %v701 = vpack.c.b16 %v573, %v565
    %v702 = vpack.c.b16 %v574, %v566
    %831 = vmatprep.subr.bf16.mxu0 %v576
    %832 = vmatpush1.bf16.msra.mxu0 %v575
    %833 = vmatprep.subr.bf16.mxu0 %v584
    %834 = vmatpush1.bf16.msra.mxu0 %v583
    %835 = vmatprep.subr.bf16.mxu0 %v592
    %836 = vmatpush1.bf16.msra.mxu0 %v591
    %837 = vmatprep.subr.bf16.mxu0 %v600
    %838 = vmatpush1.bf16.msra.mxu0 %v599
    %839 = vmatprep.subr.bf16.mxu0 %v608
    %840 = vmatpush1.bf16.msra.mxu0 %v607
    %841 = vmatprep.subr.bf16.mxu0 %v616
    %842 = vmatpush1.bf16.msra.mxu0 %v615
    %843 = vmatprep.subr.bf16.mxu0 %v624
    %844 = vmatpush1.bf16.msra.mxu0 %v623
    %845 = vmatprep.subr.bf16.mxu0 %v632
    %846 = vmatpush1.bf16.msra.mxu0 %v631
    %847 = vmatprep.subr.bf16.mxu0 %v640
    %848 = vmatpush1.bf16.msra.mxu0 %v639
    %849 = vmatprep.subr.bf16.mxu0 %v648
    %850 = vmatpush1.bf16.msra.mxu0 %v647
    %851 = vmatprep.subr.bf16.mxu0 %v656
    %852 = vmatpush1.bf16.msra.mxu0 %v655
    %853 = vmatprep.subr.bf16.mxu0 %v664
    %854 = vmatpush1.bf16.msra.mxu0 %v663
    %855 = vmatprep.subr.bf16.mxu0 %v672
    %856 = vmatpush1.bf16.msra.mxu0 %v671
    %857 = vmatprep.subr.bf16.mxu0 %v680
    %858 = vmatpush1.bf16.msra.mxu0 %v679
    %859 = vmatprep.subr.bf16.mxu0 %v688
    %860 = vmatpush1.bf16.msra.mxu0 %v687
    %861 = vmatprep.subr.bf16.mxu0 %v696
    %862 = vmatpush1.bf16.msra.mxu0 %v695
    %863 = vmatprep.mubr.bf16.mxu0 %v188
    %864 = vmatmul.mubr.bf16.gmra.mrb[0].mxu0 %v187
    %v865 = vpop.f32.mrb[0].mxu0
    %v866 = vadd.f32 0.0, %v865
    %v867 = vpop.f32.mrb[0].mxu0
    %v868 = vadd.f32 0.0, %v867
    %v869 = vpop.f32.mrb[0].mxu0
    %v870 = vpop.f32.mrb[0].mxu0
    %871 = vdwg.mxu0
    %872 = vmatprep.subr.bf16.mxu0 %v578
    %873 = vmatpush1.bf16.msra.mxu0 %v577
    %874 = vmatprep.subr.bf16.mxu0 %v586
    %875 = vmatpush1.bf16.msra.mxu0 %v585
    %876 = vmatprep.subr.bf16.mxu0 %v594
    %877 = vmatpush1.bf16.msra.mxu0 %v593
    %878 = vmatprep.subr.bf16.mxu0 %v602
    %879 = vmatpush1.bf16.msra.mxu0 %v601
    %880 = vmatprep.subr.bf16.mxu0 %v610
    %881 = vmatpush1.bf16.msra.mxu0 %v609
    %882 = vmatprep.subr.bf16.mxu0 %v618
    %883 = vmatpush1.bf16.msra.mxu0 %v617
    %884 = vmatprep.subr.bf16.mxu0 %v626
    %885 = vmatpush1.bf16.msra.mxu0 %v625
    %886 = vmatprep.subr.bf16.mxu0 %v634
    %887 = vmatpush1.bf16.msra.mxu0 %v633
    %888 = vmatprep.subr.bf16.mxu0 %v642
    %889 = vmatpush1.bf16.msra.mxu0 %v641
    %890 = vmatprep.subr.bf16.mxu0 %v650
    %891 = vmatpush1.bf16.msra.mxu0 %v649
    %892 = vmatprep.subr.bf16.mxu0 %v658
    %893 = vmatpush1.bf16.msra.mxu0 %v657
    %894 = vmatprep.subr.bf16.mxu0 %v666
    %895 = vmatpush1.bf16.msra.mxu0 %v665
    %896 = vmatprep.subr.bf16.mxu0 %v674
    %897 = vmatpush1.bf16.msra.mxu0 %v673
    %898 = vmatprep.subr.bf16.mxu0 %v682
    %899 = vmatpush1.bf16.msra.mxu0 %v681
    %900 = vmatprep.subr.bf16.mxu0 %v690
    %901 = vmatpush1.bf16.msra.mxu0 %v689
    %902 = vmatprep.subr.bf16.mxu0 %v698
    %903 = vmatpush1.bf16.msra.mxu0 %v697
    %904 = vmatprep.mubr.bf16.mxu0 %v188
    %905 = vmatmul.mubr.bf16.gmra.mrb[0].mxu0 %v187
    %v906 = vpop.f32.mrb[0].mxu0
    %v907 = vadd.f32 0.0, %v906
    %v908 = vpop.f32.mrb[0].mxu0
    %v909 = vadd.f32 0.0, %v908
    %v910 = vpop.f32.mrb[0].mxu0
    %v911 = vpop.f32.mrb[0].mxu0
    %912 = vdwg.mxu0
    %913 = vmatprep.subr.bf16.mxu0 %v580
    %914 = vmatpush1.bf16.msra.mxu0 %v579
    %915 = vmatprep.subr.bf16.mxu0 %v588
    %916 = vmatpush1.bf16.msra.mxu0 %v587
    %917 = vmatprep.subr.bf16.mxu0 %v596
    %918 = vmatpush1.bf16.msra.mxu0 %v595
    %919 = vmatprep.subr.bf16.mxu0 %v604
    %920 = vmatpush1.bf16.msra.mxu0 %v603
    %921 = vmatprep.subr.bf16.mxu0 %v612
    %922 = vmatpush1.bf16.msra.mxu0 %v611
    %923 = vmatprep.subr.bf16.mxu0 %v620
    %924 = vmatpush1.bf16.msra.mxu0 %v619
    %925 = vmatprep.subr.bf16.mxu0 %v628
    %926 = vmatpush1.bf16.msra.mxu0 %v627
    %927 = vmatprep.subr.bf16.mxu0 %v636
    %928 = vmatpush1.bf16.msra.mxu0 %v635
    %929 = vmatprep.subr.bf16.mxu0 %v644
    %930 = vmatpush1.bf16.msra.mxu0 %v643
    %931 = vmatprep.subr.bf16.mxu0 %v652
    %932 = vmatpush1.bf16.msra.mxu0 %v651
    %933 = vmatprep.subr.bf16.mxu0 %v660
    %934 = vmatpush1.bf16.msra.mxu0 %v659
    %935 = vmatprep.subr.bf16.mxu0 %v668
    %936 = vmatpush1.bf16.msra.mxu0 %v667
    %937 = vmatprep.subr.bf16.mxu0 %v676
    %938 = vmatpush1.bf16.msra.mxu0 %v675
    %939 = vmatprep.subr.bf16.mxu0 %v684
    %940 = vmatpush1.bf16.msra.mxu0 %v683
    %941 = vmatprep.subr.bf16.mxu0 %v692
    %942 = vmatpush1.bf16.msra.mxu0 %v691
    %943 = vmatprep.subr.bf16.mxu0 %v700
    %944 = vmatpush1.bf16.msra.mxu0 %v699
    %945 = vmatprep.mubr.bf16.mxu0 %v188
    %946 = vmatmul.mubr.bf16.gmra.mrb[0].mxu0 %v187
    %v947 = vpop.f32.mrb[0].mxu0
    %v948 = vadd.f32 0.0, %v947
    %v949 = vpop.f32.mrb[0].mxu0
    %v950 = vadd.f32 0.0, %v949
    %v951 = vpop.f32.mrb[0].mxu0
    %v952 = vpop.f32.mrb[0].mxu0
    %953 = vdwg.mxu0
    %954 = vmatprep.subr.bf16.mxu0 %v582
    %955 = vmatpush1.bf16.msra.mxu0 %v581
    %956 = vmatprep.subr.bf16.mxu0 %v590
    %957 = vmatpush1.bf16.msra.mxu0 %v589
    %958 = vmatprep.subr.bf16.mxu0 %v598
    %959 = vmatpush1.bf16.msra.mxu0 %v597
    %960 = vmatprep.subr.bf16.mxu0 %v606
    %961 = vmatpush1.bf16.msra.mxu0 %v605
    %962 = vmatprep.subr.bf16.mxu0 %v614
    %963 = vmatpush1.bf16.msra.mxu0 %v613
    %964 = vmatprep.subr.bf16.mxu0 %v622
    %965 = vmatpush1.bf16.msra.mxu0 %v621
    %966 = vmatprep.subr.bf16.mxu0 %v630
    %967 = vmatpush1.bf16.msra.mxu0 %v629
    %968 = vmatprep.subr.bf16.mxu0 %v638
    %969 = vmatpush1.bf16.msra.mxu0 %v637
    %970 = vmatprep.subr.bf16.mxu0 %v646
    %971 = vmatpush1.bf16.msra.mxu0 %v645
    %972 = vmatprep.subr.bf16.mxu0 %v654
    %973 = vmatpush1.bf16.msra.mxu0 %v653
    %974 = vmatprep.subr.bf16.mxu0 %v662
    %975 = vmatpush1.bf16.msra.mxu0 %v661
    %976 = vmatprep.subr.bf16.mxu0 %v670
    %977 = vmatpush1.bf16.msra.mxu0 %v669
    %978 = vmatprep.subr.bf16.mxu0 %v678
    %979 = vmatpush1.bf16.msra.mxu0 %v677
    %980 = vmatprep.subr.bf16.mxu0 %v686
    %981 = vmatpush1.bf16.msra.mxu0 %v685
    %982 = vmatprep.subr.bf16.mxu0 %v694
    %983 = vmatpush1.bf16.msra.mxu0 %v693
    %984 = vmatprep.subr.bf16.mxu0 %v702
    %985 = vmatpush1.bf16.msra.mxu0 %v701
    %986 = vmatprep.mubr.bf16.mxu0 %v188
    %987 = vmatmul.mubr.bf16.gmra.mrb[0].mxu0 %v187
    %v988 = vpop.f32.mrb[0].mxu0
    %v989 = vadd.f32 0.0, %v988
    %v990 = vpop.f32.mrb[0].mxu0
    %v991 = vadd.f32 0.0, %v990
    %v992 = vpop.f32.mrb[0].mxu0
    %v993 = vpop.f32.mrb[0].mxu0
    %994 = vdwg.mxu0
    %v995 = vld [vmem:[#allocation7] sm:$0xff]
    %v997 = vlaneseq
    %v998 = vshrl.u32 %v997, 7
    %v999 = vsub.s32 0, %v998
    %v1000 = vrot.slane %v995, %v999
    %v1001 = vlaneseq
    %v1002 = vshrl.u32 %v1001, 7
    %v1003 = vsub.s32 1, %v1002
    %v1004 = vrot.slane %v995, %v1003
    %v1005 = vlaneseq
    %v1006 = vshrl.u32 %v1005, 7
    %v1007 = vsub.s32 2, %v1006
    %v1008 = vrot.slane %v995, %v1007
    %v1009 = vlaneseq
    %v1010 = vshrl.u32 %v1009, 7
    %v1011 = vsub.s32 3, %v1010
    %v1012 = vrot.slane %v995, %v1011
    %v1013 = vlaneseq
    %v1014 = vshrl.u32 %v1013, 7
    %v1015 = vsub.s32 4, %v1014
    %v1016 = vrot.slane %v995, %v1015
    %v1017 = vlaneseq
    %v1018 = vshrl.u32 %v1017, 7
    %v1019 = vsub.s32 5, %v1018
    %v1020 = vrot.slane %v995, %v1019
    %v1021 = vlaneseq
    %v1022 = vshrl.u32 %v1021, 7
    %v1023 = vsub.s32 6, %v1022
    %v1024 = vrot.slane %v995, %v1023
    %v1025 = vlaneseq
    %v1026 = vshrl.u32 %v1025, 7
    %v1027 = vsub.s32 7, %v1026
    %v1028 = vrot.slane %v995, %v1027
    %v1037 = vmul.f32 %v866, %v1000
    %v1038 = vmul.f32 %v868, %v1004
    %v1039 = vmul.f32 %v907, %v1008
    %v1040 = vmul.f32 %v909, %v1012
    %v1041 = vmul.f32 %v948, %v1016
    %v1042 = vmul.f32 %v950, %v1020
    %v1043 = vmul.f32 %v989, %v1024
    %v1044 = vmul.f32 %v991, %v1028
    %v1045 = vld [vmem:[%s3] sm:$0xff]
    %v1047 = vlaneseq
    %v1048 = vshrl.u32 %v1047, 7
    %v1049 = vsub.s32 0, %v1048
    %v1050 = vrot.slane %v1045, %v1049
    %v1051 = vlaneseq
    %v1052 = vshrl.u32 %v1051, 7
    %v1053 = vsub.s32 1, %v1052
    %v1054 = vrot.slane %v1045, %v1053
    %v1055 = vlaneseq
    %v1056 = vshrl.u32 %v1055, 7
    %v1057 = vsub.s32 2, %v1056
    %v1058 = vrot.slane %v1045, %v1057
    %v1059 = vlaneseq
    %v1060 = vshrl.u32 %v1059, 7
    %v1061 = vsub.s32 3, %v1060
    %v1062 = vrot.slane %v1045, %v1061
    %v1063 = vlaneseq
    %v1064 = vshrl.u32 %v1063, 7
    %v1065 = vsub.s32 4, %v1064
    %v1066 = vrot.slane %v1045, %v1065
    %v1067 = vlaneseq
    %v1068 = vshrl.u32 %v1067, 7
    %v1069 = vsub.s32 5, %v1068
    %v1070 = vrot.slane %v1045, %v1069
    %v1071 = vlaneseq
    %v1072 = vshrl.u32 %v1071, 7
    %v1073 = vsub.s32 6, %v1072
    %v1074 = vrot.slane %v1045, %v1073
    %v1075 = vlaneseq
    %v1076 = vshrl.u32 %v1075, 7
    %v1077 = vsub.s32 7, %v1076
    %v1078 = vrot.slane %v1045, %v1077
    %v1087 = vadd.f32 %v1037, %v1050
    %v1088 = vadd.f32 %v1038, %v1054
    %v1089 = vadd.f32 %v1039, %v1058
    %v1090 = vadd.f32 %v1040, %v1062
    %v1091 = vadd.f32 %v1041, %v1066
    %v1092 = vadd.f32 %v1042, %v1070
    %v1093 = vadd.f32 %v1043, %v1074
    %v1094 = vadd.f32 %v1044, %v1078
    %v1095 = vmax.f32 %v1087, 0.0
    %v1096 = vmax.f32 %v1088, 0.0
    %v1097 = vmax.f32 %v1089, 0.0
    %v1098 = vmax.f32 %v1090, 0.0
    %v1099 = vmax.f32 %v1091, 0.0
    %v1100 = vmax.f32 %v1092, 0.0
    %v1101 = vmax.f32 %v1093, 0.0
    %v1102 = vmax.f32 %v1094, 0.0
    %v1103 = vpack.c.bf16 %v1095, %v1095
    %v1104 = vpack.c.bf16 %v1096, %v1096
    %v1105 = vpack.c.bf16 %v1097, %v1097
    %v1106 = vpack.c.bf16 %v1098, %v1098
    %v1107 = vpack.c.bf16 %v1099, %v1099
    %v1108 = vpack.c.bf16 %v1100, %v1100
    %v1109 = vpack.c.bf16 %v1101, %v1101
    %v1110 = vpack.c.bf16 %v1102, %v1102
    %v1119 = vunpack.c.l.b16 %v1103
    %v1120 = vunpack.c.l.b16 %v1104
    %v1121 = vunpack.c.l.b16 %v1105
    %v1122 = vunpack.c.l.b16 %v1106
    %v1123 = vunpack.c.l.b16 %v1107
    %v1124 = vunpack.c.l.b16 %v1108
    %v1125 = vunpack.c.l.b16 %v1109
    %v1126 = vunpack.c.l.b16 %v1110
    %v1127 = vpack.c.b16 %v1120, %v1119
    %v1128 = vpack.c.b16 %v1122, %v1121
    %v1129 = vpack.c.b16 %v1124, %v1123
    %v1130 = vpack.c.b16 %v1126, %v1125
    %1135 = vst [vmem:[#allocation8] sm:$0xff] %v1127
    %1136 = vst [vmem:[#allocation8 + $0x8] sm:$0xff] %v1128
    %1137 = vst [vmem:[#allocation8 + $0x10] sm:$0xff] %v1129
    %1138 = vst [vmem:[#allocation8 + $0x18] sm:$0xff] %v1130
    // Predicated region
    $region30: #{tpu_custom_call.1} parent=1 // pred_check
      _
    $region31: #{tpu_custom_call.1} parent=1 // pred_check_branch
      %1140 = sbr.rel (0) target = $region33
    $region32: #{tpu_custom_call.1} parent=1 // pred_region
      %s1142 = ssub.s32 512, 512
      %1143 = vsyncadd [#allocation4], %s1142
      %s1145 = sshll.u32 [#allocation8], 4
      %s1146 = int_to_ptr.vmem [resolvable:$true] %s1145
      %1148 = dma.vmem_to_hbm [thread:$0]  %s1146, 512, %s4, [#allocation4]
    $region33: #{tpu_custom_call.1} parent=1 // pred_fallthru
      _
    // Predicated region
    $region34: #{tpu_custom_call.1} parent=1 // pred_check
      _
    $region35: #{tpu_custom_call.1} parent=1 // pred_check_branch
      %1150 = sbr.rel (0) target = $region37
    $region36: #{tpu_custom_call.1} parent=1 // pred_region
      %1151 = dma.done [#allocation4], 512
    $region37: #{tpu_custom_call.1} parent=1 // pred_fallthru
      _
    %1152 = vsyncpa [#allocation3], 1
    %1153 = vsyncpa [#allocation6], 1
    %1154 = vsyncpa [#allocation4], 1

</llo_original>
